<compile_context>
chip_gen: v5e
topology: v5e:2x2
jax: 0.10.0
libtpu: 0.0.40
codegen_flags: <defaults>
</compile_context>

<pallas_src>
import functools
import math

import jax
import jax.numpy as jnp
from jax import lax
from jax.experimental import pallas as pl
from jax.experimental.pallas import tpu as pltpu


def _lm_prediction_kernel(x_ref, w1_ref, b1_ref, g_ref, beta_ref,
                          w2_ref, b2_ref, o_ref, t_ref, *, eps):
    j = pl.program_id(1)

    @pl.when(j == 0)
    def _transform():
        # ---- Transform: dense (H->H) + exact erf-GELU + LayerNorm (all f32 math) ----
        h = jnp.dot(x_ref[...], w1_ref[...], preferred_element_type=jnp.float32)
        h = h + b1_ref[...].astype(jnp.float32)
        # exact (erf-based) GELU -- matches HF BERT's 'gelu'
        h = h * 0.5 * (1.0 + lax.erf(h * jnp.float32(1.0 / math.sqrt(2.0))))
        # LayerNorm over hidden axis
        mu = jnp.mean(h, axis=-1, keepdims=True)
        c = h - mu
        var = jnp.mean(c * c, axis=-1, keepdims=True)
        y = c * lax.rsqrt(var + jnp.float32(eps))
        y = y * g_ref[...].astype(jnp.float32) + beta_ref[...].astype(jnp.float32)
        # Store already in the matmul dtype (bf16 in production) -> no per-j cast.
        t_ref[...] = y.astype(t_ref.dtype)

    # ---- decoder: transformed rows @ W2t_tile + b2_tile ----
    logits = jnp.dot(t_ref[...], w2_ref[...], preferred_element_type=jnp.float32)
    logits = logits + b2_ref[...].astype(jnp.float32)
    o_ref[...] = logits.astype(o_ref.dtype)


def _round_up(x, m):
    return ((x + m - 1) // m) * m


def lm_prediction(hidden_states, dense_w, dense_b, ln_gamma, ln_beta,
                  dec_w, dec_b, *, eps=1e-12, matmul_dtype=None, out_dtype=None,
                  tm=None, tv=None):
    """BERT LM head.

    hidden_states: (B, S, H); dense_w: (H, H) and dec_w: (V, H) in PyTorch (out, in)
    layout; dense_b/ln_gamma/ln_beta: (H,); dec_b: (V,).

    matmul_dtype: e.g. jnp.bfloat16 on v6e/v7x -> MXU runs bf16 with f32 accumulation.
    """
    B, S, H = hidden_states.shape
    V, H2 = dec_w.shape
    assert H2 == H
    M = B * S
    if out_dtype is None:
        out_dtype = hidden_states.dtype

    # ---- one-time weight prep (in production do this at weight-load time, not per call)
    w1t = jnp.transpose(dense_w)   # (H_in, H_out)
    w2t = jnp.transpose(dec_w)     # (H, V)
    x2d = hidden_states.reshape(M, H)
    if matmul_dtype is not None:
        x2d = x2d.astype(matmul_dtype)
        w1t = w1t.astype(matmul_dtype)
        w2t = w2t.astype(matmul_dtype)
    b1 = dense_b.reshape(1, H).astype(jnp.float32)
    gamma = ln_gamma.reshape(1, H).astype(jnp.float32)
    beta = ln_beta.reshape(1, H).astype(jnp.float32)
    b2 = dec_b.reshape(1, V).astype(jnp.float32)

    # ---- tiles: lane-dense vocab tile (mult of 128), sublane-aligned row tile (mult of 8)
    if tv is None:
        tv = min(512, _round_up(V, 128))
    if tm is None:
        # Per-generation tuning knob: ~512 (v5e/v7x) .. 1024 (v6e).  On v7x also keep
        # pl.cdiv(M, tm) >= 2 for large M so both TensorCores get row tiles.
        tm = min(512, _round_up(M, 8))
    grid = (pl.cdiv(M, tm), pl.cdiv(V, tv))

    t_dtype = matmul_dtype if matmul_dtype is not None else jnp.float32

    # ---- explicit VMEM budget (double-buffered inputs/outputs + scratch) + headroom
    in_sz = jnp.dtype(x2d.dtype).itemsize
    out_sz = jnp.dtype(out_dtype).itemsize
    t_sz = jnp.dtype(t_dtype).itemsize
    est = (2 * tm * H * in_sz          # x row tile
           + 2 * H * H * in_sz         # dense weight (grid-invariant, still 2 bufs)
           + 2 * 3 * H * 4             # dense bias + LN gamma/beta
           + 2 * H * tv * in_sz        # decoder weight tile
           + 2 * tv * 4                # decoder bias tile
           + 2 * tm * tv * out_sz      # output tile
           + tm * H * t_sz)            # transform scratch
    vmem_limit = int(min(max(est * 5 // 4 + (2 << 20), 32 << 20), 96 << 20))

    kernel = functools.partial(_lm_prediction_kernel, eps=eps)

    out2d = pl.pallas_call(
        kernel,
        out_shape=jax.ShapeDtypeStruct((M, V), out_dtype),
        grid_spec=pltpu.PrefetchScalarGridSpec(
            num_scalar_prefetch=0,
            grid=grid,
            in_specs=[
                pl.BlockSpec((tm, H), lambda i, j: (i, 0)),   # x rows (resident over j)
                pl.BlockSpec((H, H), lambda i, j: (0, 0)),    # dense weight (in,out)
                pl.BlockSpec((1, H), lambda i, j: (0, 0)),    # dense bias
                pl.BlockSpec((1, H), lambda i, j: (0, 0)),    # LN gamma
                pl.BlockSpec((1, H), lambda i, j: (0, 0)),    # LN beta
                pl.BlockSpec((H, tv), lambda i, j: (0, j)),   # decoder weight tile (H,tv)
                pl.BlockSpec((1, tv), lambda i, j: (0, j)),   # decoder bias tile
            ],
            out_specs=pl.BlockSpec((tm, tv), lambda i, j: (i, j)),
            scratch_shapes=[pltpu.VMEM((tm, H), t_dtype)],    # transformed rows
        ),
        compiler_params=pltpu.CompilerParams(
            dimension_semantics=("parallel", "arbitrary"),
            vmem_limit_bytes=vmem_limit),
    )(x2d, w1t, b1, gamma, beta, w2t, b2)

    return out2d.reshape(B, S, V)


if __name__ == "__main__":
    # config: hidden_size=32, vocab_size=512, hidden_act="gelu", layer_norm_eps=1e-12
    batch, seq, hidden, vocab = 2, 8, 32, 512
    eps = 1e-12

    key = jax.random.PRNGKey(0)
    k_x, k_w1, k_b1, k_g, k_be, k_w2, k_b2 = jax.random.split(key, 7)

    hidden_states = jax.random.normal(k_x, (batch, seq, hidden), dtype=jnp.float32)
    dense_w = jax.random.normal(k_w1, (hidden, hidden), dtype=jnp.float32) * 0.02
    dense_b = jax.random.normal(k_b1, (hidden,), dtype=jnp.float32) * 0.02
    ln_gamma = 1.0 + 0.1 * jax.random.normal(k_g, (hidden,), dtype=jnp.float32)
    ln_beta = 0.1 * jax.random.normal(k_be, (hidden,), dtype=jnp.float32)
    dec_w = jax.random.normal(k_w2, (vocab, hidden), dtype=jnp.float32) * 0.02
    dec_b = 0.02 * jax.random.normal(k_b2, (vocab,), dtype=jnp.float32)

    # ---- plain-JAX reference ----
    h = hidden_states @ dense_w.T + dense_b
    h = h * 0.5 * (1.0 + lax.erf(h / jnp.float32(math.sqrt(2.0))))
    mu = h.mean(-1, keepdims=True)
    var = ((h - mu) ** 2).mean(-1, keepdims=True)
    hn = (h - mu) / jnp.sqrt(var + eps) * ln_gamma + ln_beta
    ref = hn @ dec_w.T + dec_b

    # f32 path (strict check)
    out = lm_prediction(hidden_states, dense_w, dense_b, ln_gamma, ln_beta,
                        dec_w, dec_b, eps=eps)
    out = jax.block_until_ready(out)
    assert out.shape == (batch, seq, vocab)
    assert jnp.allclose(out, ref, atol=1e-4, rtol=1e-4), float(jnp.max(jnp.abs(out - ref)))

    # bf16-MXU production path (weights/x cast once in the wrapper) -- relaxed tolerance
    out_bf = lm_prediction(hidden_states, dense_w, dense_b, ln_gamma, ln_beta,
                           dec_w, dec_b, eps=eps, matmul_dtype=jnp.bfloat16)
    out_bf = jax.block_until_ready(out_bf)
    assert out_bf.shape == (batch, seq, vocab)
    assert jnp.allclose(out_bf, ref, atol=5e-2, rtol=5e-2), \
        float(jnp.max(jnp.abs(out_bf - ref)))

    print("KERNEL_OK")
</pallas_src>

<mosaic_0001>
module attributes {stable_mosaic.version = 11 : i64} {
  func.func @_lm_prediction_kernel(%arg0: i32, %arg1: i32, %arg2: memref<16x32xf32, #tpu.memory_space<vmem>>, %arg3: memref<32x32xf32, #tpu.memory_space<vmem>>, %arg4: memref<1x32xf32, #tpu.memory_space<vmem>>, %arg5: memref<1x32xf32, #tpu.memory_space<vmem>>, %arg6: memref<1x32xf32, #tpu.memory_space<vmem>>, %arg7: memref<32x512xf32, #tpu.memory_space<vmem>>, %arg8: memref<1x512xf32, #tpu.memory_space<vmem>>, %arg9: memref<16x512xf32, #tpu.memory_space<vmem>>, %arg10: memref<16x32xf32, #tpu.memory_space<vmem>>) attributes {dimension_semantics = [#tpu.dimension_semantics<parallel>, #tpu.dimension_semantics<arbitrary>], iteration_bounds = array<i64: 1, 1>, scalar_prefetch = 0 : i64, scratch_operands = 1 : i64, tpu.core_type = #tpu.core_type<tc>, window_params = [{transform_indices = @transform_0, window_bounds = array<i64: 16, 32>}, {pipeline_mode = #tpu.pipeline_mode<synchronous>, transform_indices = @transform_1, window_bounds = array<i64: 32, 32>}, {pipeline_mode = #tpu.pipeline_mode<synchronous>, transform_indices = @transform_2, window_bounds = array<i64: 1, 32>}, {pipeline_mode = #tpu.pipeline_mode<synchronous>, transform_indices = @transform_3, window_bounds = array<i64: 1, 32>}, {pipeline_mode = #tpu.pipeline_mode<synchronous>, transform_indices = @transform_4, window_bounds = array<i64: 1, 32>}, {transform_indices = @transform_5, window_bounds = array<i64: 32, 512>}, {transform_indices = @transform_6, window_bounds = array<i64: 1, 512>}, {transform_indices = @transform_7, window_bounds = array<i64: 16, 512>}]} {
    %c0_i32 = arith.constant 0 : i32
    %0 = arith.cmpi eq, %arg1, %c0_i32 : i32
    %1 = arith.extui %0 : i1 to i32
    %c0_i32_0 = arith.constant 0 : i32
    %2 = arith.cmpi ne, %1, %c0_i32_0 : i32
    scf.if %2 {
      %c0_8 = arith.constant 0 : index
      %c0_9 = arith.constant 0 : index
      %10 = vector.load %arg2[%c0_8, %c0_9] : memref<16x32xf32, #tpu.memory_space<vmem>>, vector<16x32xf32>
      %c0_10 = arith.constant 0 : index
      %c0_11 = arith.constant 0 : index
      %11 = vector.load %arg3[%c0_10, %c0_11] : memref<32x32xf32, #tpu.memory_space<vmem>>, vector<32x32xf32>
      %cst_12 = arith.constant dense<0.000000e+00> : vector<16x32xf32>
      %12 = tpu.matmul %10, %11, %cst_12 {dimension_numbers = #tpu.dot_dimension_numbers<[1], [0], [0], [1], [0, 0, 1, 1], [], []>} : vector<16x32xf32>, vector<32x32xf32>, vector<16x32xf32> -> vector<16x32xf32>
      %c0_13 = arith.constant 0 : index
      %c0_14 = arith.constant 0 : index
      %13 = vector.load %arg4[%c0_13, %c0_14] : memref<1x32xf32, #tpu.memory_space<vmem>>, vector<1x32xf32>
      %14 = vector.broadcast %13 : vector<1x32xf32> to vector<16x32xf32>
      %15 = arith.addf %12, %14 : vector<16x32xf32>
      %cst_15 = arith.constant 5.000000e-01 : f32
      %16 = vector.broadcast %cst_15 : f32 to vector<16x32xf32>
      %17 = arith.mulf %15, %16 : vector<16x32xf32>
      %cst_16 = arith.constant 0.707106769 : f32
      %18 = vector.broadcast %cst_16 : f32 to vector<16x32xf32>
      %19 = arith.mulf %15, %18 : vector<16x32xf32>
      %20 = math.erf %19 : vector<16x32xf32>
      %cst_17 = arith.constant 1.000000e+00 : f32
      %21 = vector.broadcast %cst_17 : f32 to vector<16x32xf32>
      %22 = arith.addf %21, %20 : vector<16x32xf32>
      %23 = arith.mulf %17, %22 : vector<16x32xf32>
      %cst_18 = arith.constant dense<0.000000e+00> : vector<16xf32>
      %24 = vector.multi_reduction <add>, %23, %cst_18 [1] : vector<16x32xf32> to vector<16xf32>
      %25 = vector.shape_cast %24 : vector<16xf32> to vector<16x1xf32>
      %cst_19 = arith.constant 3.200000e+01 : f32
      %26 = vector.broadcast %cst_19 : f32 to vector<16x1xf32>
      %27 = arith.divf %25, %26 : vector<16x1xf32>
      %28 = vector.broadcast %27 : vector<16x1xf32> to vector<16x32xf32>
      %29 = arith.subf %23, %28 : vector<16x32xf32>
      %30 = arith.mulf %29, %29 : vector<16x32xf32>
      %cst_20 = arith.constant dense<0.000000e+00> : vector<16xf32>
      %31 = vector.multi_reduction <add>, %30, %cst_20 [1] : vector<16x32xf32> to vector<16xf32>
      %32 = vector.shape_cast %31 : vector<16xf32> to vector<16x1xf32>
      %cst_21 = arith.constant 3.200000e+01 : f32
      %33 = vector.broadcast %cst_21 : f32 to vector<16x1xf32>
      %34 = arith.divf %32, %33 : vector<16x1xf32>
      %cst_22 = arith.constant 9.99999996E-13 : f32
      %35 = vector.broadcast %cst_22 : f32 to vector<16x1xf32>
      %36 = arith.addf %34, %35 : vector<16x1xf32>
      %37 = math.rsqrt %36 : vector<16x1xf32>
      %38 = vector.broadcast %37 : vector<16x1xf32> to vector<16x32xf32>
      %39 = arith.mulf %29, %38 : vector<16x32xf32>
      %c0_23 = arith.constant 0 : index
      %c0_24 = arith.constant 0 : index
      %40 = vector.load %arg5[%c0_23, %c0_24] : memref<1x32xf32, #tpu.memory_space<vmem>>, vector<1x32xf32>
      %41 = vector.broadcast %40 : vector<1x32xf32> to vector<16x32xf32>
      %42 = arith.mulf %39, %41 : vector<16x32xf32>
      %c0_25 = arith.constant 0 : index
      %c0_26 = arith.constant 0 : index
      %43 = vector.load %arg6[%c0_25, %c0_26] : memref<1x32xf32, #tpu.memory_space<vmem>>, vector<1x32xf32>
      %44 = vector.broadcast %43 : vector<1x32xf32> to vector<16x32xf32>
      %45 = arith.addf %42, %44 : vector<16x32xf32>
      %c0_27 = arith.constant 0 : index
      %c0_28 = arith.constant 0 : index
      %46 = vector.load %arg10[%c0_27, %c0_28] : memref<16x32xf32, #tpu.memory_space<vmem>>, vector<16x32xf32>
      tpu.vector_store %arg10[%c0_27, %c0_28], %45 {strides = array<i32>} : memref<16x32xf32, #tpu.memory_space<vmem>>, vector<16x32xf32>,
    } else {
    }
    %c0 = arith.constant 0 : index
    %c0_1 = arith.constant 0 : index
    %3 = vector.load %arg10[%c0, %c0_1] : memref<16x32xf32, #tpu.memory_space<vmem>>, vector<16x32xf32>
    %c0_2 = arith.constant 0 : index
    %c0_3 = arith.constant 0 : index
    %4 = vector.load %arg7[%c0_2, %c0_3] : memref<32x512xf32, #tpu.memory_space<vmem>>, vector<32x512xf32>
    %cst = arith.constant dense<0.000000e+00> : vector<16x512xf32>
    %5 = tpu.matmul %3, %4, %cst {dimension_numbers = #tpu.dot_dimension_numbers<[1], [0], [0], [1], [0, 0, 1, 1], [], []>} : vector<16x32xf32>, vector<32x512xf32>, vector<16x512xf32> -> vector<16x512xf32>
    %c0_4 = arith.constant 0 : index
    %c0_5 = arith.constant 0 : index
    %6 = vector.load %arg8[%c0_4, %c0_5] : memref<1x512xf32, #tpu.memory_space<vmem>>, vector<1x512xf32>
    %7 = vector.broadcast %6 : vector<1x512xf32> to vector<16x512xf32>
    %8 = arith.addf %5, %7 : vector<16x512xf32>
    %c0_6 = arith.constant 0 : index
    %c0_7 = arith.constant 0 : index
    %9 = vector.load %arg9[%c0_6, %c0_7] : memref<16x512xf32, #tpu.memory_space<vmem>>, vector<16x512xf32>
    tpu.vector_store %arg9[%c0_6, %c0_7], %8 {strides = array<i32>} : memref<16x512xf32, #tpu.memory_space<vmem>>, vector<16x512xf32>,
    return
  }
  func.func @transform_0(%arg0: i32, %arg1: i32) -> (i32, i32) {
    %c0_i32 = arith.constant 0 : i32
    %c0_i32_0 = arith.constant 0 : i32
    return %arg0, %c0_i32 : i32, i32
  }
  func.func @transform_1(%arg0: i32, %arg1: i32) -> (i32, i32) {
    %c0_i32 = arith.constant 0 : i32
    %c0_i32_0 = arith.constant 0 : i32
    %c0_i32_1 = arith.constant 0 : i32
    return %c0_i32, %c0_i32_0 : i32, i32
  }
  func.func @transform_2(%arg0: i32, %arg1: i32) -> (i32, i32) {
    %c0_i32 = arith.constant 0 : i32
    %c0_i32_0 = arith.constant 0 : i32
    %c0_i32_1 = arith.constant 0 : i32
    return %c0_i32, %c0_i32_0 : i32, i32
  }
  func.func @transform_3(%arg0: i32, %arg1: i32) -> (i32, i32) {
    %c0_i32 = arith.constant 0 : i32
    %c0_i32_0 = arith.constant 0 : i32
    %c0_i32_1 = arith.constant 0 : i32
    return %c0_i32, %c0_i32_0 : i32, i32
  }
  func.func @transform_4(%arg0: i32, %arg1: i32) -> (i32, i32) {
    %c0_i32 = arith.constant 0 : i32
    %c0_i32_0 = arith.constant 0 : i32
    %c0_i32_1 = arith.constant 0 : i32
    return %c0_i32, %c0_i32_0 : i32, i32
  }
  func.func @transform_5(%arg0: i32, %arg1: i32) -> (i32, i32) {
    %c0_i32 = arith.constant 0 : i32
    %c0_i32_0 = arith.constant 0 : i32
    return %c0_i32, %arg1 : i32, i32
  }
  func.func @transform_6(%arg0: i32, %arg1: i32) -> (i32, i32) {
    %c0_i32 = arith.constant 0 : i32
    %c0_i32_0 = arith.constant 0 : i32
    return %c0_i32, %arg1 : i32, i32
  }
  func.func @transform_7(%arg0: i32, %arg1: i32) -> (i32, i32) {
    %c0_i32 = arith.constant 0 : i32
    return %arg0, %arg1 : i32, i32
  }
}

</mosaic_0001>

<llo_original>
// kernel: tpu_custom_call.1
$region0: #{tpu_custom_call.1}
  #allocation0 [shape = 'u32[]', space=smem, size = 0x4, offset = 0x4, fixed_abs, tag = 'smem constant byte address 0x4 - core index']
  #allocation1 [shape = 'u32[72,128]{1,0:T(1,128)}', space=vmem, size = 0x9000, scoped, tag = 'internal scratch']
  #allocation2 [shape = 'f32[16,32]{1,0:T(8,128)}', space=vmem, size = 0x2000, scoped, tag = 'scratch operand']
  %s0 = inlined_call_operand.hbm [shape: f32[16,32], index: 0, kind: input, shape index: {}]
  %s1 = inlined_call_operand.hbm [shape: f32[32,32], index: 1, kind: input, shape index: {}]
  %s2 = inlined_call_operand.vmem [shape: f32[1,32], index: 2, kind: input, shape index: {}]
  %s3 = inlined_call_operand.hbm [shape: f32[1,32], index: 3, kind: input, shape index: {}]
  %s4 = inlined_call_operand.hbm [shape: f32[1,32], index: 4, kind: input, shape index: {}]
  %s5 = inlined_call_operand.hbm [shape: f32[32,512], index: 5, kind: input, shape index: {}]
  %s6 = inlined_call_operand.vmem [shape: f32[1,512], index: 6, kind: input, shape index: {}]
  %s7 = inlined_call_operand.hbm [shape: f32[16,512], index: 7, kind: output, shape index: {}]
  %s8 = sld [smem:[#allocation0]]
  $region62: #{tpu_custom_call.1} parent=0
    _
  %s10 = ssub.s32 1, %s8
  %s11 = scalar_select 0, %s10, %s8
  $region1: #{tpu_custom_call.1} parent=0
    #allocation3 [shape = 'u8[8192]{0}', space=vmem, size = 0x2000, scoped, tag = 'input window, operand 0, single buffered']
    #allocation4 [shape = 's32[1]{0}', space=sflag, size = 0x4, scoped, tag = 'scoped memory for tpu_custom_call.1']
    #allocation5 [shape = 's32[1]{0}', space=sflag, size = 0x4, scoped, tag = 'scoped memory for tpu_custom_call.1']
    #allocation6 [shape = 'u8[16384]{0}', space=vmem, size = 0x4000, scoped, tag = 'input window, operand 1, single buffered']
    #allocation7 [shape = 's32[1]{0}', space=sflag, size = 0x4, scoped, tag = 'scoped memory for tpu_custom_call.1']
    #allocation8 [shape = 'u8[512]{0}', space=vmem, size = 0x400, scoped, tag = 'input window, operand 3, single buffered']
    #allocation9 [shape = 'u8[512]{0}', space=vmem, size = 0x400, scoped, tag = 'input window, operand 4, single buffered']
    #allocation10 [shape = 's32[1]{0}', space=sflag, size = 0x4, scoped, tag = 'scoped memory for tpu_custom_call.1']
    #allocation11 [shape = 'u8[65536]{0}', space=vmem, size = 0x10000, scoped, tag = 'input window, operand 5, single buffered']
    #allocation12 [shape = 'u8[32768]{0}', space=vmem, size = 0x8000, scoped, tag = 'output window, operand 0, single buffered']
    %12 = vsyncpa [#allocation4], 0
    %13 = vsyncpa [#allocation7], 0
    %14 = vsyncpa [#allocation10], 0
    %15 = vsyncpa [#allocation5], 0
    // Predicated region
    $region2: #{tpu_custom_call.1} parent=1 // pred_check
      _
    $region3: #{tpu_custom_call.1} parent=1 // pred_check_branch
      %17 = sbr.rel (0) target = $region5
    $region4: #{tpu_custom_call.1} parent=1 // pred_region
      %19 = vsyncadd [#allocation4], 0
      %s20 = sshll.u32 %s0, 4
      %s21 = int_to_ptr.hbm [resolvable:$true] %s20
      %s22 = sshll.u32 [#allocation3], 4
      %s23 = int_to_ptr.vmem [resolvable:$true] %s22
      %28 = dma.hbm_to_vmem [thread:$0]  %s21, 256, %s23, [#allocation4], 128, 128, 8
    $region5: #{tpu_custom_call.1} parent=1 // pred_fallthru
      _
    // Predicated region
    $region6: #{tpu_custom_call.1} parent=1 // pred_check
      _
    $region7: #{tpu_custom_call.1} parent=1 // pred_check_branch
      %30 = sbr.rel (0) target = $region9
    $region8: #{tpu_custom_call.1} parent=1 // pred_region
      %32 = vsyncadd [#allocation7], 0
      %s33 = sshll.u32 %s1, 4
      %s34 = int_to_ptr.hbm [resolvable:$true] %s33
      %s35 = sshll.u32 [#allocation6], 4
      %s36 = int_to_ptr.vmem [resolvable:$true] %s35
      %41 = dma.hbm_to_vmem [thread:$0]  %s34, 512, %s36, [#allocation7], 128, 128, 8
    $region9: #{tpu_custom_call.1} parent=1 // pred_fallthru
      _
    // Predicated region
    $region10: #{tpu_custom_call.1} parent=1 // pred_check
      _
    $region11: #{tpu_custom_call.1} parent=1 // pred_check_branch
      %43 = sbr.rel (0) target = $region13
    $region12: #{tpu_custom_call.1} parent=1 // pred_region
      _
    $region13: #{tpu_custom_call.1} parent=1 // pred_fallthru
      _
    // Predicated region
    $region14: #{tpu_custom_call.1} parent=1 // pred_check
      _
    $region15: #{tpu_custom_call.1} parent=1 // pred_check_branch
      %45 = sbr.rel (0) target = $region17
    $region16: #{tpu_custom_call.1} parent=1 // pred_region
      %47 = vsyncadd [#allocation7], 0
      %s49 = sshll.u32 %s3, 4
      %s50 = int_to_ptr.hbm [resolvable:$true] %s49
      %s51 = sshll.u32 [#allocation8], 4
      %s52 = int_to_ptr.vmem [resolvable:$true] %s51
      %54 = dma.hbm_to_vmem [thread:$0]  %s50, 16, %s52, [#allocation7]
    $region17: #{tpu_custom_call.1} parent=1 // pred_fallthru
      _
    // Predicated region
    $region18: #{tpu_custom_call.1} parent=1 // pred_check
      _
    $region19: #{tpu_custom_call.1} parent=1 // pred_check_branch
      %56 = sbr.rel (0) target = $region21
    $region20: #{tpu_custom_call.1} parent=1 // pred_region
      %58 = vsyncadd [#allocation10], 0
      %s60 = sshll.u32 %s4, 4
      %s61 = int_to_ptr.hbm [resolvable:$true] %s60
      %s62 = sshll.u32 [#allocation9], 4
      %s63 = int_to_ptr.vmem [resolvable:$true] %s62
      %65 = dma.hbm_to_vmem [thread:$0]  %s61, 16, %s63, [#allocation10]
    $region21: #{tpu_custom_call.1} parent=1 // pred_fallthru
      _
    // Predicated region
    $region22: #{tpu_custom_call.1} parent=1 // pred_check
      _
    $region23: #{tpu_custom_call.1} parent=1 // pred_check_branch
      %67 = sbr.rel (0) target = $region25
    $region24: #{tpu_custom_call.1} parent=1 // pred_region
      %69 = vsyncadd [#allocation10], 0
      %s70 = sshll.u32 %s5, 4
      %s71 = int_to_ptr.hbm [resolvable:$true] %s70
      %s72 = sshll.u32 [#allocation11], 4
      %s73 = int_to_ptr.vmem [resolvable:$true] %s72
      %78 = dma.hbm_to_vmem [thread:$0]  %s71, 2048, %s73, [#allocation10], 512, 512, 32
    $region25: #{tpu_custom_call.1} parent=1 // pred_fallthru
      _
    // Predicated region
    $region26: #{tpu_custom_call.1} parent=1 // pred_check
      _
    $region27: #{tpu_custom_call.1} parent=1 // pred_check_branch
      %80 = sbr.rel (0) target = $region29
    $region28: #{tpu_custom_call.1} parent=1 // pred_region
      _
    $region29: #{tpu_custom_call.1} parent=1 // pred_fallthru
      _
    // Predicated region
    $region30: #{tpu_custom_call.1} parent=1 // pred_check
      _
    $region31: #{tpu_custom_call.1} parent=1 // pred_check_branch
      %82 = sbr.rel (0) target = $region33
    $region32: #{tpu_custom_call.1} parent=1 // pred_region
      %84 = dma.done [#allocation4], 256
    $region33: #{tpu_custom_call.1} parent=1 // pred_fallthru
      _
    // Predicated region
    $region34: #{tpu_custom_call.1} parent=1 // pred_check
      _
    $region35: #{tpu_custom_call.1} parent=1 // pred_check_branch
      %86 = sbr.rel (0) target = $region37
    $region36: #{tpu_custom_call.1} parent=1 // pred_region
      %88 = dma.done [#allocation7], 512
    $region37: #{tpu_custom_call.1} parent=1 // pred_fallthru
      _
    // Predicated region
    $region38: #{tpu_custom_call.1} parent=1 // pred_check
      _
    $region39: #{tpu_custom_call.1} parent=1 // pred_check_branch
      %90 = sbr.rel (0) target = $region41
    $region40: #{tpu_custom_call.1} parent=1 // pred_region
      %92 = dma.done [#allocation7], 16
    $region41: #{tpu_custom_call.1} parent=1 // pred_fallthru
      _
    // Predicated region
    $region42: #{tpu_custom_call.1} parent=1 // pred_check
      _
    $region43: #{tpu_custom_call.1} parent=1 // pred_check_branch
      %94 = sbr.rel (0) target = $region45
    $region44: #{tpu_custom_call.1} parent=1 // pred_region
      %96 = dma.done [#allocation10], 16
    $region45: #{tpu_custom_call.1} parent=1 // pred_fallthru
      _
    // Predicated region
    $region46: #{tpu_custom_call.1} parent=1 // pred_check
      _
    $region47: #{tpu_custom_call.1} parent=1 // pred_check_branch
      %98 = sbr.rel (0) target = $region49
    $region48: #{tpu_custom_call.1} parent=1 // pred_region
      %100 = dma.done [#allocation10], 2048
    $region49: #{tpu_custom_call.1} parent=1 // pred_fallthru
      _
    %p101 = scmp.eq.s32.totalorder 0, 0
    // Predicated region
    $region50: #{tpu_custom_call.1} parent=1 // pred_check
      %p102 = pneg %p101
    $region51: #{tpu_custom_call.1} parent=1 // pred_check_branch
      %104 = sbr.rel (%p102) target = $region53
    $region52: #{tpu_custom_call.1} parent=1 // pred_region
      %v105 = vld [vmem:[#allocation3] sm:$0xff]
      %v106 = vld [vmem:[#allocation3 + $0x8] sm:$0xff]
      %v107 = vld [vmem:[#allocation6] sm:$0xff]
      %v108 = vld [vmem:[#allocation6 + $0x8] sm:$0xff]
      %v109 = vld [vmem:[#allocation6 + $0x10] sm:$0xff]
      %v110 = vld [vmem:[#allocation6 + $0x18] sm:$0xff]
      %v111 = vld [vmem:[%s2] sm:$0x1]
      %v113 = vperm.slane %v111, 0
      %vm115 = vcmask 261120
      %v117 = vsel %vm115, %v105, 0
      %v120 = vsel %vm115, %v106, 0
      %122 = vmatpush.msra.mxu0 0.0
      %123 = vmatpush.msra.mxu0 0.0
      %124 = vmatpush.msra.mxu0 0.0
      %125 = vmatpush.msra.mxu0 0.0
      %126 = vmatpush.msra.mxu0 0.0
      %127 = vmatpush.msra.mxu0 0.0
      %128 = vmatpush.msra.mxu0 0.0
      %129 = vmatpush.msra.mxu0 0.0
      %130 = vmatpush.msra.mxu0 0.0
      %131 = vmatpush.msra.mxu0 0.0
      %132 = vmatpush.msra.mxu0 0.0
      %133 = vmatpush.msra.mxu0 0.0
      %134 = vmatpush.msra.mxu0 %v110
      %135 = vmatpush.msra.mxu0 %v109
      %136 = vmatpush.msra.mxu0 %v108
      %137 = vmatpush.msra.mxu0 %v107
      %138 = vmatmul.f32.gmra.mxu0 %v117
      %v139 = vpop.f32.mrf.mxu0
      %v140 = vadd.f32 %v113, %v139
      %141 = vmatmul.f32.gmra.mxu0 %v120
      %v142 = vpop.f32.mrf.mxu0
      %v143 = vadd.f32 %v113, %v142
      %144 = vdwg.mxu0
      %v145 = vmul.f32 %v140, 0.5
      %v146 = vmul.f32 %v143, 0.5
      %v147 = vmul.f32 %v140, 0.70710677
      %v148 = vmul.f32 %v143, 0.70710677
      %v149 = vmul.f32 %v147, %v147
      %v150 = vmin.f32 16.0, %v149
      %v151 = vmul.f32 %v150, 2.1237322e-06
      %v152 = vadd.f32 %v151, 0.00028619796
      %v153 = vmul.f32 %v150, %v152
      %v154 = vadd.f32 %v153, 0.0036580483
      %v155 = vmul.f32 %v150, %v154
      %v156 = vadd.f32 %v155, 0.05243302
      %v157 = vmul.f32 %v150, %v156
      %v158 = vadd.f32 %v157, 0.18741608
      %v159 = vmul.f32 %v150, %v158
      %v160 = vadd.f32 %v159, 1.1283791
      %v161 = vmul.f32 %v147, %v160
      %v162 = vmul.f32 %v150, 3.8918573e-05
      %v163 = vadd.f32 %v162, 0.001143296
      %v164 = vmul.f32 %v150, %v163
      %v165 = vadd.f32 %v164, 0.014752088
      %v166 = vmul.f32 %v150, %v165
      %v167 = vadd.f32 %v166, 0.112945676
      %v168 = vmul.f32 %v150, %v167
      %v169 = vadd.f32 %v168, 0.4994258
      %v170 = vmul.f32 %v150, %v169
      %v171 = vadd.f32 %v170, 1.0
      %v172 = vrcp.pop %v171
      %v173 = vmul.f32 %v171, %v172
      %v174 = vsub.f32 1.0, %v173
      %v175 = vmul.f32 %v172, %v174
      %v176 = vadd.f32 %v172, %v175
      %vm177 = vweird.f32 %v171
      %vm178 = vweird.f32 %v172
      %vm179 = vmor %vm177, %vm178
      %v180 = vsel %vm179, %v172, %v176
      %v181 = vand.u32 2147483647, %v171
      %vm182 = vcmp.eq.f32.partialorder %v181, 8.507059e+37
      %v183 = vand.u32 %v171, 2147483648
      %v184 = vor.u32 1.1754944e-38, %v183
      %v185 = vsel %vm182, %v184, %v180
      %v186 = vmul.f32 %v161, %v185
      %v187 = vmin.f32 %v186, 1.0
      %v188 = vmax.f32 %v187, -1.0
      %v189 = vmul.f32 %v148, %v148
      %v190 = vmin.f32 16.0, %v189
      %v191 = vmul.f32 %v190, 2.1237322e-06
      %v192 = vadd.f32 %v191, 0.00028619796
      %v193 = vmul.f32 %v190, %v192
      %v194 = vadd.f32 %v193, 0.0036580483
      %v195 = vmul.f32 %v190, %v194
      %v196 = vadd.f32 %v195, 0.05243302
      %v197 = vmul.f32 %v190, %v196
      %v198 = vadd.f32 %v197, 0.18741608
      %v199 = vmul.f32 %v190, %v198
      %v200 = vadd.f32 %v199, 1.1283791
      %v201 = vmul.f32 %v148, %v200
      %v202 = vmul.f32 %v190, 3.8918573e-05
      %v203 = vadd.f32 %v202, 0.001143296
      %v204 = vmul.f32 %v190, %v203
      %v205 = vadd.f32 %v204, 0.014752088
      %v206 = vmul.f32 %v190, %v205
      %v207 = vadd.f32 %v206, 0.112945676
      %v208 = vmul.f32 %v190, %v207
      %v209 = vadd.f32 %v208, 0.4994258
      %v210 = vmul.f32 %v190, %v209
      %v211 = vadd.f32 %v210, 1.0
      %v212 = vrcp.pop %v211
      %v213 = vmul.f32 %v211, %v212
      %v214 = vsub.f32 1.0, %v213
      %v215 = vmul.f32 %v212, %v214
      %v216 = vadd.f32 %v212, %v215
      %vm217 = vweird.f32 %v211
      %vm218 = vweird.f32 %v212
      %vm219 = vmor %vm217, %vm218
      %v220 = vsel %vm219, %v212, %v216
      %v221 = vand.u32 2147483647, %v211
      %vm222 = vcmp.eq.f32.partialorder %v221, 8.507059e+37
      %v223 = vand.u32 %v211, 2147483648
      %v224 = vor.u32 1.1754944e-38, %v223
      %v225 = vsel %vm222, %v224, %v220
      %v226 = vmul.f32 %v201, %v225
      %v227 = vmin.f32 %v226, 1.0
      %v228 = vmax.f32 %v227, -1.0
      %v229 = vadd.f32 %v188, 1.0
      %v230 = vadd.f32 %v228, 1.0
      %v231 = vmul.f32 %v145, %v229
      %v232 = vmul.f32 %v146, %v230
      %v233 = vsel %vm115, %v231, 0.0
      %234 = vadd.xlane.f32.xlu0 %v233
      %v235 = vpop.xlane.xlu0 %234
      %v236 = vsel %vm115, %v232, 0.0
      %237 = vadd.xlane.f32.xlu0 %v236
      %v238 = vpop.xlane.xlu0 %237
      %v239 = vrcp.pop 32.0
      %v240 = vmul.f32 32.0, %v239
      %v241 = vsub.f32 1.0, %v240
      %v242 = vmul.f32 %v239, %v241
      %v243 = vadd.f32 %v239, %v242
      %vm244 = vweird.f32 %v239
      %v245 = vsel %vm244, %v239, %v243
      %v246 = vmul.f32 %v235, %v245
      %v247 = vmul.f32 %v238, %v245
      %v248 = vsub.f32 %v231, %v246
      %v249 = vsub.f32 %v232, %v247
      %v250 = vmul.f32 %v248, %v248
      %v251 = vmul.f32 %v249, %v249
      %v252 = vsel %vm115, %v250, 0.0
      %253 = vadd.xlane.f32.xlu0 %v252
      %v254 = vpop.xlane.xlu0 %253
      %v255 = vsel %vm115, %v251, 0.0
      %256 = vadd.xlane.f32.xlu0 %v255
      %v257 = vpop.xlane.xlu0 %256
      %v258 = vmul.f32 %v254, %v245
      %v259 = vmul.f32 %v257, %v245
      %v260 = vadd.f32 %v258, 1e-12
      %v261 = vadd.f32 %v259, 1e-12
      %v262 = vrsqrt.pop %v260
      %v263 = vmul.f32 %v262, %v260
      %v264 = vmul.f32 %v263, %v262
      %v265 = vmul.f32 0.5, %v264
      %v266 = vsub.f32 1.5, %v265
      %v267 = vmul.f32 %v262, %v266
      %vm268 = vweird.f32 %v260
      %vm269 = vweird.f32 %v262
      %vm270 = vmor %vm268, %vm269
      %v271 = vsel %vm270, %v262, %v267
      %v272 = vrsqrt.pop %v261
      %v273 = vmul.f32 %v272, %v261
      %v274 = vmul.f32 %v273, %v272
      %v275 = vmul.f32 0.5, %v274
      %v276 = vsub.f32 1.5, %v275
      %v277 = vmul.f32 %v272, %v276
      %vm278 = vweird.f32 %v261
      %vm279 = vweird.f32 %v272
      %vm280 = vmor %vm278, %vm279
      %v281 = vsel %vm280, %v272, %v277
      %v282 = vmul.f32 %v248, %v271
      %v283 = vmul.f32 %v249, %v281
      %v284 = vld [vmem:[#allocation8] sm:$0x1]
      %v286 = vperm.slane %v284, 0
      %v288 = vmul.f32 %v282, %v286
      %v289 = vmul.f32 %v283, %v286
      %v290 = vld [vmem:[#allocation9] sm:$0x1]
      %v292 = vperm.slane %v290, 0
      %v294 = vadd.f32 %v288, %v292
      %v295 = vadd.f32 %v289, %v292
      %296 = vst.msk [vmem:[#allocation2] sm:$0xff] %vm115, %v294
      %297 = vst.msk [vmem:[#allocation2 + $0x8] sm:$0xff] %vm115, %v295
    $region53: #{tpu_custom_call.1} parent=1 // pred_fallthru
      _
    %v298 = vld [vmem:[#allocation2] sm:$0xff]
    %v299 = vld [vmem:[#allocation2 + $0x8] sm:$0xff]
    %v300 = vld [vmem:[#allocation11] sm:$0xff]
    %v301 = vld [vmem:[#allocation11 + $0x8] sm:$0xff]
    %v302 = vld [vmem:[#allocation11 + $0x10] sm:$0xff]
    %v303 = vld [vmem:[#allocation11 + $0x18] sm:$0xff]
    %v304 = vld [vmem:[#allocation11 + $0x20] sm:$0xff]
    %v305 = vld [vmem:[#allocation11 + $0x28] sm:$0xff]
    %v306 = vld [vmem:[#allocation11 + $0x30] sm:$0xff]
    %v307 = vld [vmem:[#allocation11 + $0x38] sm:$0xff]
    %v308 = vld [vmem:[#allocation11 + $0x40] sm:$0xff]
    %v309 = vld [vmem:[#allocation11 + $0x48] sm:$0xff]
    %v310 = vld [vmem:[#allocation11 + $0x50] sm:$0xff]
    %v311 = vld [vmem:[#allocation11 + $0x58] sm:$0xff]
    %v312 = vld [vmem:[#allocation11 + $0x60] sm:$0xff]
    %v313 = vld [vmem:[#allocation11 + $0x68] sm:$0xff]
    %v314 = vld [vmem:[#allocation11 + $0x70] sm:$0xff]
    %v315 = vld [vmem:[#allocation11 + $0x78] sm:$0xff]
    %v316 = vld [vmem:[%s6] sm:$0xf]
    %v318 = vperm.slane %v316, 0
    %v319 = vperm.slane %v316, 1
    %v320 = vperm.slane %v316, 2
    %v321 = vperm.slane %v316, 3
    %vm326 = vcmask 261120
    %v328 = vsel %vm326, %v298, 0
    %v331 = vsel %vm326, %v299, 0
    %333 = vmatpush.msra.mxu0 0.0
    %334 = vmatpush.msra.mxu0 0.0
    %335 = vmatpush.msra.mxu0 0.0
    %336 = vmatpush.msra.mxu0 0.0
    %337 = vmatpush.msra.mxu0 0.0
    %338 = vmatpush.msra.mxu0 0.0
    %339 = vmatpush.msra.mxu0 0.0
    %340 = vmatpush.msra.mxu0 0.0
    %341 = vmatpush.msra.mxu0 0.0
    %342 = vmatpush.msra.mxu0 0.0
    %343 = vmatpush.msra.mxu0 0.0
    %344 = vmatpush.msra.mxu0 0.0
    %345 = vmatpush.msra.mxu0 %v312
    %346 = vmatpush.msra.mxu0 %v308
    %347 = vmatpush.msra.mxu0 %v304
    %348 = vmatpush.msra.mxu0 %v300
    %349 = vmatmul.f32.gmra.mxu0 %v328
    %v350 = vpop.f32.mrf.mxu0
    %v351 = vadd.f32 %v318, %v350
    %352 = vmatmul.f32.gmra.mxu0 %v331
    %v353 = vpop.f32.mrf.mxu0
    %v354 = vadd.f32 %v318, %v353
    %355 = vdwg.mxu0
    %356 = vmatpush.msra.mxu0 0.0
    %357 = vmatpush.msra.mxu0 0.0
    %358 = vmatpush.msra.mxu0 0.0
    %359 = vmatpush.msra.mxu0 0.0
    %360 = vmatpush.msra.mxu0 0.0
    %361 = vmatpush.msra.mxu0 0.0
    %362 = vmatpush.msra.mxu0 0.0
    %363 = vmatpush.msra.mxu0 0.0
    %364 = vmatpush.msra.mxu0 0.0
    %365 = vmatpush.msra.mxu0 0.0
    %366 = vmatpush.msra.mxu0 0.0
    %367 = vmatpush.msra.mxu0 0.0
    %368 = vmatpush.msra.mxu0 %v313
    %369 = vmatpush.msra.mxu0 %v309
    %370 = vmatpush.msra.mxu0 %v305
    %371 = vmatpush.msra.mxu0 %v301
    %372 = vmatmul.f32.gmra.mxu0 %v328
    %v373 = vpop.f32.mrf.mxu0
    %v374 = vadd.f32 %v319, %v373
    %375 = vmatmul.f32.gmra.mxu0 %v331
    %v376 = vpop.f32.mrf.mxu0
    %v377 = vadd.f32 %v319, %v376
    %378 = vdwg.mxu0
    %379 = vmatpush.msra.mxu0 0.0
    %380 = vmatpush.msra.mxu0 0.0
    %381 = vmatpush.msra.mxu0 0.0
    %382 = vmatpush.msra.mxu0 0.0
    %383 = vmatpush.msra.mxu0 0.0
    %384 = vmatpush.msra.mxu0 0.0
    %385 = vmatpush.msra.mxu0 0.0
    %386 = vmatpush.msra.mxu0 0.0
    %387 = vmatpush.msra.mxu0 0.0
    %388 = vmatpush.msra.mxu0 0.0
    %389 = vmatpush.msra.mxu0 0.0
    %390 = vmatpush.msra.mxu0 0.0
    %391 = vmatpush.msra.mxu0 %v314
    %392 = vmatpush.msra.mxu0 %v310
    %393 = vmatpush.msra.mxu0 %v306
    %394 = vmatpush.msra.mxu0 %v302
    %395 = vmatmul.f32.gmra.mxu0 %v328
    %v396 = vpop.f32.mrf.mxu0
    %v397 = vadd.f32 %v320, %v396
    %398 = vmatmul.f32.gmra.mxu0 %v331
    %v399 = vpop.f32.mrf.mxu0
    %v400 = vadd.f32 %v320, %v399
    %401 = vdwg.mxu0
    %402 = vmatpush.msra.mxu0 0.0
    %403 = vmatpush.msra.mxu0 0.0
    %404 = vmatpush.msra.mxu0 0.0
    %405 = vmatpush.msra.mxu0 0.0
    %406 = vmatpush.msra.mxu0 0.0
    %407 = vmatpush.msra.mxu0 0.0
    %408 = vmatpush.msra.mxu0 0.0
    %409 = vmatpush.msra.mxu0 0.0
    %410 = vmatpush.msra.mxu0 0.0
    %411 = vmatpush.msra.mxu0 0.0
    %412 = vmatpush.msra.mxu0 0.0
    %413 = vmatpush.msra.mxu0 0.0
    %414 = vmatpush.msra.mxu0 %v315
    %415 = vmatpush.msra.mxu0 %v311
    %416 = vmatpush.msra.mxu0 %v307
    %417 = vmatpush.msra.mxu0 %v303
    %418 = vmatmul.f32.gmra.mxu0 %v328
    %v419 = vpop.f32.mrf.mxu0
    %v420 = vadd.f32 %v321, %v419
    %421 = vmatmul.f32.gmra.mxu0 %v331
    %v422 = vpop.f32.mrf.mxu0
    %v423 = vadd.f32 %v321, %v422
    %424 = vdwg.mxu0
    %425 = vst [vmem:[#allocation12] sm:$0xff] %v351
    %426 = vst [vmem:[#allocation12 + $0x8] sm:$0xff] %v374
    %427 = vst [vmem:[#allocation12 + $0x10] sm:$0xff] %v397
    %428 = vst [vmem:[#allocation12 + $0x18] sm:$0xff] %v420
    %429 = vst [vmem:[#allocation12 + $0x20] sm:$0xff] %v354
    %430 = vst [vmem:[#allocation12 + $0x28] sm:$0xff] %v377
    %431 = vst [vmem:[#allocation12 + $0x30] sm:$0xff] %v400
    %432 = vst [vmem:[#allocation12 + $0x38] sm:$0xff] %v423
    // Predicated region
    $region54: #{tpu_custom_call.1} parent=1 // pred_check
      _
    $region55: #{tpu_custom_call.1} parent=1 // pred_check_branch
      %434 = sbr.rel (0) target = $region57
    $region56: #{tpu_custom_call.1} parent=1 // pred_region
      %436 = vsyncadd [#allocation5], 0
      %s437 = sshll.u32 [#allocation12], 4
      %s438 = int_to_ptr.vmem [resolvable:$true] %s437
      %s439 = sshll.u32 %s7, 4
      %s440 = int_to_ptr.hbm [resolvable:$true] %s439
      %445 = dma.vmem_to_hbm [thread:$0]  %s438, 1024, %s440, [#allocation5], 512, 512, 32
    $region57: #{tpu_custom_call.1} parent=1 // pred_fallthru
      _
    // Predicated region
    $region58: #{tpu_custom_call.1} parent=1 // pred_check
      _
    $region59: #{tpu_custom_call.1} parent=1 // pred_check_branch
      %447 = sbr.rel (0) target = $region61
    $region60: #{tpu_custom_call.1} parent=1 // pred_region
      %449 = dma.done [#allocation5], 1024
    $region61: #{tpu_custom_call.1} parent=1 // pred_fallthru
      _
    %450 = vsyncpa [#allocation4], 1
    %451 = vsyncpa [#allocation7], 1
    %452 = vsyncpa [#allocation10], 1
    %453 = vsyncpa [#allocation5], 1

</llo_original>
